<compile_context>
chip_gen: v6e
topology: v6e:2x2x1
jax: 0.10.0
libtpu: 0.0.40
codegen_flags: <defaults>
</compile_context>

<pallas_src>
import math

import jax
import jax.numpy as jnp
from jax.experimental import pallas as pl
from jax.experimental.pallas import tpu as pltpu

LANE = 128
MAX_PACKED_LANE = 8192          # cap on the lcm-based packed lane width
TARGET_BLOCK_BYTES = 2 << 20    # ~2 MiB per input block -> ~8 MiB double-buffered
                                # (in + out), safe under v5e's 16 MiB scoped VMEM


def _round_up(a, b):
    return ((a + b - 1) // b) * b


def _cdiv(a, b):
    return (a + b - 1) // b


# ----------------------------------------------------------------------------
# Pallas kernel: fused normalize -> (identity _forward) -> denormalize
# ----------------------------------------------------------------------------
def base_fwd_kernel(x_ref, sb_ref, o_ref):
    # TODO(synk): Base._forward is abstract (raises NotImplementedError in the
    # reference); identity is used as the placeholder model body here.
    x = x_ref[...].astype(jnp.float32)            # (tile_r, tile_c)
    sb = sb_ref[...]                              # (2, tile_c) f32: [scale; bias]
    o_ref[...] = (x * sb[0] + sb[1]).astype(o_ref.dtype)


def base_forward(x, in_mean, in_std, out_mean, out_std, *,
                 recover_pred_unit=True):
    """x: (..., C); stats: (C,) each.  Returns array of the same shape/dtype."""
    orig_shape = x.shape
    orig_dtype = x.dtype
    if x.size == 0:
        return x
    C = orig_shape[-1]
    R = x.size // C

    # ---- fold the two Normalizers into one per-channel (scale, bias) -------
    in_mean = in_mean.reshape(-1).astype(jnp.float32)
    in_std = in_std.reshape(-1).astype(jnp.float32)
    if recover_pred_unit:
        out_mean = out_mean.reshape(-1).astype(jnp.float32)
        out_std = out_std.reshape(-1).astype(jnp.float32)
        scale = out_std / in_std
        bias = out_mean - in_mean * scale
    else:
        scale = 1.0 / in_std
        bias = -in_mean * scale

    itemsize = x.dtype.itemsize
    # Native sublane packing: 8 rows for f32, 16 for bf16/f16, 32 for int8/fp8.
    sub = max(8, 32 // max(itemsize, 1))

    # ---- lane layout: free contiguous reshape, never a pad -----------------
    g = math.gcd(C, LANE)
    pack = LANE // g
    lane_lcm = C * pack                      # lcm(C, 128)
    if pack > 1 and lane_lcm <= MAX_PACKED_LANE and R % pack == 0:
        # Pack `pack` consecutive rows into one lane-dense row (pure reshape).
        rows = R // pack
        lane = lane_lcm
        x2 = x.reshape(rows, lane)
        scale = jnp.tile(scale, pack)
        bias = jnp.tile(bias, pack)
    else:
        # C already a multiple of 128, or the pack doesn't divide R: keep the
        # full-C last dim (no padding; last-dim block == full array dim).
        rows = R
        lane = C
        x2 = x.reshape(rows, lane)
    sb = jnp.stack([scale, bias])            # (2, lane) f32

    # ---- column tiling only if a single sublane-group already blows budget --
    if lane * itemsize * sub > TARGET_BLOCK_BYTES and lane > LANE:
        tile_c = max(LANE, (TARGET_BLOCK_BYTES // (sub * itemsize)) // LANE * LANE)
    else:
        tile_c = lane

    # ---- row tiling: ~2 MiB blocks, sublane-aligned, >=2 grid steps if possible
    tile_r = max(sub, (TARGET_BLOCK_BYTES // max(tile_c * itemsize, 1)) // sub * sub)
    if tile_r >= rows:
        if rows >= 2 * sub:
            # keep at least 2 grid steps so both v7x TensorCores get work
            tile_r = _round_up(_cdiv(rows, 2), sub)
        else:
            tile_r = rows                    # tiny input: full-dim block, grid=1
    grid = (_cdiv(rows, tile_r), _cdiv(lane, tile_c))

    cost = pl.CostEstimate(
        flops=2 * rows * lane,
        transcendentals=0,
        bytes_accessed=2 * rows * lane * itemsize + 2 * lane * 4,
    )

    out = pl.pallas_call(
        base_fwd_kernel,
        out_shape=jax.ShapeDtypeStruct((rows, lane), orig_dtype),
        grid_spec=pl.GridSpec(
            grid=grid,
            in_specs=[
                pl.BlockSpec((tile_r, tile_c), lambda i, j: (i, j)),  # x rows
                pl.BlockSpec((2, tile_c), lambda i, j: (0, j)),       # scale/bias
            ],
            out_specs=pl.BlockSpec((tile_r, tile_c), lambda i, j: (i, j)),
        ),
        compiler_params=pltpu.CompilerParams(
            dimension_semantics=("parallel", "parallel")),
        cost_estimate=cost,
    )(x2, sb)

    # Ragged blocks are handled by Pallas (dropped OOB writes) -> no crop; the
    # reshape back is a free contiguous reshape.
    return out.reshape(orig_shape)


# ----------------------------------------------------------------------------
# Deterministic "Normalizer" statistics (glue, plain JAX).
#   mean = acc_sum / max(acc_count, 1)
#   std  = max(sqrt(acc_sum_sq / count - mean^2), std_eps)
# ----------------------------------------------------------------------------
def make_normalizer_stats(samples, std_eps=1e-8):
    flat = samples.reshape(-1, samples.shape[-1]).astype(jnp.float32)
    count = float(max(flat.shape[0], 1))
    acc_sum = flat.sum(axis=0)
    acc_sq = (flat * flat).sum(axis=0)
    mean = acc_sum / count
    var = acc_sq / count - mean * mean
    std = jnp.maximum(jnp.sqrt(jnp.maximum(var, 0.0)), std_eps)
    return mean, std


def base_forward_ref(x, in_mean, in_std, out_mean, out_std,
                     recover_pred_unit=True):
    h = (x.astype(jnp.float32) - in_mean) / in_std   # _preprocess
    y = h                                            # _forward (identity placeholder)
    if recover_pred_unit:                            # _postprocess
        y = y * out_std + out_mean
    return y.astype(x.dtype)


if __name__ == "__main__":
    key = jax.random.PRNGKey(0)
    k1, k2, k3, k4, k5 = jax.random.split(key, 5)

    C = 32  # input_dim = target_dim = 32 (identity _forward)

    # Deterministic "accumulated" data for the two Normalizers.
    acc_in = 2.0 * jax.random.normal(k1, (64, C), jnp.float32) + 1.5
    acc_out = 0.5 * jax.random.normal(k2, (64, C), jnp.float32) - 0.7
    in_mean, in_std = make_normalizer_stats(acc_in)
    out_mean, out_std = make_normalizer_stats(acc_out)

    # Case 1: packable shape (R % pack == 0), recover_pred_unit=True.
    x1 = jax.random.normal(k3, (2, 8, C), jnp.float32)
    y1 = jax.block_until_ready(
        base_forward(x1, in_mean, in_std, out_mean, out_std,
                     recover_pred_unit=True))
    y1_ref = base_forward_ref(x1, in_mean, in_std, out_mean, out_std, True)
    assert y1.shape == x1.shape and y1.dtype == x1.dtype
    assert jnp.allclose(y1, y1_ref, atol=1e-5, rtol=1e-5)

    # Case 2: ragged row count (full-C fallback + partial last row block),
    # recover_pred_unit=False.
    x2 = jax.random.normal(k4, (3, 37, C), jnp.float32)
    y2 = jax.block_until_ready(
        base_forward(x2, in_mean, in_std, out_mean, out_std,
                     recover_pred_unit=False))
    y2_ref = base_forward_ref(x2, in_mean, in_std, out_mean, out_std, False)
    assert y2.shape == x2.shape and y2.dtype == x2.dtype
    assert jnp.allclose(y2, y2_ref, atol=1e-5, rtol=1e-5)

    # Case 3: bf16 input (exercises 16-row sublane packing path).
    x3 = jax.random.normal(k5, (4, 16, C), jnp.float32).astype(jnp.bfloat16)
    y3 = jax.block_until_ready(
        base_forward(x3, in_mean, in_std, out_mean, out_std,
                     recover_pred_unit=True))
    y3_ref = base_forward_ref(x3, in_mean, in_std, out_mean, out_std, True)
    assert y3.shape == x3.shape and y3.dtype == x3.dtype
    assert jnp.allclose(y3.astype(jnp.float32), y3_ref.astype(jnp.float32),
                        atol=5e-2, rtol=5e-2)

    print("KERNEL_OK")
</pallas_src>

<mosaic_0001>
module attributes {stable_mosaic.version = 11 : i64} {
  func.func @base_fwd_kernel(%arg0: i32, %arg1: i32, %arg2: memref<4x128xf32, #tpu.memory_space<vmem>>, %arg3: memref<2x128xf32, #tpu.memory_space<vmem>>, %arg4: memref<4x128xf32, #tpu.memory_space<vmem>>) attributes {dimension_semantics = [#tpu.dimension_semantics<parallel>, #tpu.dimension_semantics<parallel>], iteration_bounds = array<i64: 1, 1>, scalar_prefetch = 0 : i64, scratch_operands = 0 : i64, tpu.core_type = #tpu.core_type<tc>, window_params = [{transform_indices = @transform_0, window_bounds = array<i64: 4, 128>}, {transform_indices = @transform_1, window_bounds = array<i64: 2, 128>}, {transform_indices = @transform_2, window_bounds = array<i64: 4, 128>}]} {
    %c0 = arith.constant 0 : index
    %c0_0 = arith.constant 0 : index
    %0 = vector.load %arg2[%c0, %c0_0] : memref<4x128xf32, #tpu.memory_space<vmem>>, vector<4x128xf32>
    %c0_1 = arith.constant 0 : index
    %c0_2 = arith.constant 0 : index
    %1 = vector.load %arg3[%c0_1, %c0_2] : memref<2x128xf32, #tpu.memory_space<vmem>>, vector<2x128xf32>
    %2 = vector.extract_strided_slice %1 {offsets = [0, 0], sizes = [1, 128], strides = [1, 1]} : vector<2x128xf32> to vector<1x128xf32>
    %3 = vector.shape_cast %2 : vector<1x128xf32> to vector<128xf32>
    %4 = vector.shape_cast %3 : vector<128xf32> to vector<1x128xf32>
    %5 = vector.broadcast %4 : vector<1x128xf32> to vector<4x128xf32>
    %6 = arith.mulf %0, %5 : vector<4x128xf32>
    %7 = vector.extract_strided_slice %1 {offsets = [1, 0], sizes = [1, 128], strides = [1, 1]} : vector<2x128xf32> to vector<1x128xf32>
    %8 = vector.shape_cast %7 : vector<1x128xf32> to vector<128xf32>
    %9 = vector.shape_cast %8 : vector<128xf32> to vector<1x128xf32>
    %10 = vector.broadcast %9 : vector<1x128xf32> to vector<4x128xf32>
    %11 = arith.addf %6, %10 : vector<4x128xf32>
    %c0_3 = arith.constant 0 : index
    %c0_4 = arith.constant 0 : index
    %12 = vector.load %arg4[%c0_3, %c0_4] : memref<4x128xf32, #tpu.memory_space<vmem>>, vector<4x128xf32>
    tpu.vector_store %arg4[%c0_3, %c0_4], %11 {strides = array<i32>} : memref<4x128xf32, #tpu.memory_space<vmem>>, vector<4x128xf32>,
    return
  }
  func.func @transform_0(%arg0: i32, %arg1: i32) -> (i32, i32) {
    %c0_i32 = arith.constant 0 : i32
    return %arg0, %arg1 : i32, i32
  }
  func.func @transform_1(%arg0: i32, %arg1: i32) -> (i32, i32) {
    %c0_i32 = arith.constant 0 : i32
    %c0_i32_0 = arith.constant 0 : i32
    return %c0_i32, %arg1 : i32, i32
  }
  func.func @transform_2(%arg0: i32, %arg1: i32) -> (i32, i32) {
    %c0_i32 = arith.constant 0 : i32
    return %arg0, %arg1 : i32, i32
  }
}

</mosaic_0001>

<llo_original>
// kernel: tpu_custom_call.1
$region0: #{tpu_custom_call.1}
  #allocation0 [shape = 'u32[]', space=smem, size = 0x4, offset = 0x4, fixed_abs, tag = 'smem constant byte address 0x4 - core index']
  #allocation1 [shape = 'u32[144,128]{1,0:T(1,128)}', space=vmem, size = 0x12000, scoped, tag = 'internal scratch']
  %s0 = inlined_call_operand.hbm [shape: f32[4,128], index: 0, kind: input, shape index: {}]
  %s1 = inlined_call_operand.hbm [shape: f32[2,128], index: 1, kind: input, shape index: {}]
  %s2 = inlined_call_operand.hbm [shape: f32[4,128], index: 2, kind: output, shape index: {}]
  %s3 = sld [smem:[#allocation0]]
  $region26: #{tpu_custom_call.1} parent=0
    _
  %s5 = ssub.s32 1, %s3
  %s6 = scalar_select 0, %s5, %s3
  $region1: #{tpu_custom_call.1} parent=0
    #allocation2 [shape = 'u8[2048]{0}', space=vmem, size = 0x800, scoped, tag = 'input window, operand 0, single buffered']
    #allocation3 [shape = 's32[1]{0}', space=sflag, size = 0x4, scoped, tag = 'scoped memory for tpu_custom_call.1']
    #allocation4 [shape = 's32[1]{0}', space=sflag, size = 0x4, scoped, tag = 'scoped memory for tpu_custom_call.1']
    #allocation5 [shape = 'u8[1024]{0}', space=vmem, size = 0x400, scoped, tag = 'input window, operand 1, single buffered']
    #allocation6 [shape = 's32[1]{0}', space=sflag, size = 0x4, scoped, tag = 'scoped memory for tpu_custom_call.1']
    #allocation7 [shape = 'u8[2048]{0}', space=vmem, size = 0x800, scoped, tag = 'output window, operand 0, single buffered']
    %7 = vsyncpa [#allocation3], 0
    %8 = vsyncpa [#allocation6], 0
    %9 = vsyncpa [#allocation4], 0
    // Predicated region
    $region2: #{tpu_custom_call.1} parent=1 // pred_check
      _
    $region3: #{tpu_custom_call.1} parent=1 // pred_check_branch
      %11 = sbr.rel (0) target = $region5
    $region4: #{tpu_custom_call.1} parent=1 // pred_region
      %s13 = ssub.s32 64, 64
      %14 = vsyncadd [#allocation3], %s13
      %s16 = sshll.u32 [#allocation2], 4
      %s17 = int_to_ptr.vmem [resolvable:$true] %s16
      %19 = dma.hbm_to_vmem [thread:$0]  %s0, 64, %s17, [#allocation3]
    $region5: #{tpu_custom_call.1} parent=1 // pred_fallthru
      _
    // Predicated region
    $region6: #{tpu_custom_call.1} parent=1 // pred_check
      _
    $region7: #{tpu_custom_call.1} parent=1 // pred_check_branch
      %21 = sbr.rel (0) target = $region9
    $region8: #{tpu_custom_call.1} parent=1 // pred_region
      %s23 = ssub.s32 32, 32
      %24 = vsyncadd [#allocation6], %s23
      %s26 = sshll.u32 [#allocation5], 4
      %s27 = int_to_ptr.vmem [resolvable:$true] %s26
      %29 = dma.hbm_to_vmem [thread:$0]  %s1, 32, %s27, [#allocation6]
    $region9: #{tpu_custom_call.1} parent=1 // pred_fallthru
      _
    // Predicated region
    $region10: #{tpu_custom_call.1} parent=1 // pred_check
      _
    $region11: #{tpu_custom_call.1} parent=1 // pred_check_branch
      %31 = sbr.rel (0) target = $region13
    $region12: #{tpu_custom_call.1} parent=1 // pred_region
      %32 = dma.done [#allocation3], 64
    $region13: #{tpu_custom_call.1} parent=1 // pred_fallthru
      _
    // Predicated region
    $region14: #{tpu_custom_call.1} parent=1 // pred_check
      _
    $region15: #{tpu_custom_call.1} parent=1 // pred_check_branch
      %34 = sbr.rel (0) target = $region17
    $region16: #{tpu_custom_call.1} parent=1 // pred_region
      %35 = dma.done [#allocation6], 32
    $region17: #{tpu_custom_call.1} parent=1 // pred_fallthru
      _
    %v36 = vld [vmem:[#allocation2] sm:$0xf]
    %v37 = vld [vmem:[#allocation5] sm:$0x3]
    %v38 = vlaneseq
    %v39 = vshrl.u32 %v38, 7
    %v40 = vsub.s32 0, %v39
    %v41 = vrot.slane %v37, %v40
    %v42 = vmul.f32 %v36, %v41
    %v43 = vlaneseq
    %v44 = vshrl.u32 %v43, 7
    %v45 = vsub.s32 1, %v44
    %v46 = vrot.slane %v37, %v45
    %v47 = vadd.f32 %v42, %v46
    %48 = vst [vmem:[#allocation7] sm:$0xf] %v47
    // Predicated region
    $region18: #{tpu_custom_call.1} parent=1 // pred_check
      _
    $region19: #{tpu_custom_call.1} parent=1 // pred_check_branch
      %50 = sbr.rel (0) target = $region21
    $region20: #{tpu_custom_call.1} parent=1 // pred_region
      %s52 = ssub.s32 64, 64
      %53 = vsyncadd [#allocation4], %s52
      %s55 = sshll.u32 [#allocation7], 4
      %s56 = int_to_ptr.vmem [resolvable:$true] %s55
      %58 = dma.vmem_to_hbm [thread:$0]  %s56, 64, %s2, [#allocation4]
    $region21: #{tpu_custom_call.1} parent=1 // pred_fallthru
      _
    // Predicated region
    $region22: #{tpu_custom_call.1} parent=1 // pred_check
      _
    $region23: #{tpu_custom_call.1} parent=1 // pred_check_branch
      %60 = sbr.rel (0) target = $region25
    $region24: #{tpu_custom_call.1} parent=1 // pred_region
      %61 = dma.done [#allocation4], 64
    $region25: #{tpu_custom_call.1} parent=1 // pred_fallthru
      _
    %62 = vsyncpa [#allocation3], 1
    %63 = vsyncpa [#allocation6], 1
    %64 = vsyncpa [#allocation4], 1

</llo_original>
